<compile_context>
chip_gen: v5e
topology: v5e:2x2
jax: 0.10.0
libtpu: 0.0.40
codegen_flags: <defaults>
</compile_context>

<pallas_src>
import functools

import jax
import jax.numpy as jnp
from jax import lax
from jax.experimental import pallas as pl
from jax.experimental.pallas import tpu as pltpu


def _round_up(x, m):
    return ((x + m - 1) // m) * m


def _pick_h_chunk(H):
    """Hidden-dim chunk: lane-aligned (multiple of 128), bounded at 512.

    Never falls back to hc == H for large H; instead H is zero-padded up to a
    multiple of hc in the wrapper, so the (TM, hc) fc1 intermediate stays bounded.
    """
    if H <= 512:
        return _round_up(H, 128)
    return 512


def _resffnet_kernel(x_ref, g_ref, b_ref, w1_ref, b1_ref, w2_ref, b2_ref,
                     o_ref, acc_ref, xn_ref):
    """Grid = (row tiles i, hidden-dim chunks k).  Per-step shapes:

    x_ref  : (TM, C)  f32   input rows (residual); resident across the k axis
    g/b    : (1, C)   f32   LayerNorm gamma / beta            (single-buffered)
    w1_ref : (C, HC)  bf16  fc1 weight slice, streamed over k
    b1_ref : (1, HC)  f32   fc1 bias slice
    w2_ref : (HC, C)  bf16  fc2 weight slice, streamed over k
    b2_ref : (1, C)   f32   fc2 bias                          (single-buffered)
    o_ref  : (TM, C)        output rows (written at the last k)
    acc_ref: (TM, C)  f32   VMEM accumulator (residual + b2 folded into its init)
    xn_ref : (TM, C)  bf16  LayerNorm output, computed once at k == 0
    """
    k = pl.program_id(1)

    @pl.when(k == 0)
    def _():
        x = x_ref[...].astype(jnp.float32)
        # --- BIALayerNorm: standard LayerNorm over the embedding dim, eps=1e-5 ---
        mu = jnp.mean(x, axis=-1, keepdims=True)
        xc = x - mu
        var = jnp.mean(xc * xc, axis=-1, keepdims=True)
        xn = xc * lax.rsqrt(var + 1e-5) * g_ref[...] + b_ref[...]
        xn_ref[...] = xn.astype(jnp.bfloat16)        # bf16 only at the MXU input
        # Fold residual + fc2 bias into the accumulator init (dropout p=0.0 is
        # identity), so the epilogue is a pure cast+store.
        acc_ref[...] = x + b2_ref[...]

    # fc1 chunk -> ReLU -> fc2 chunk, accumulated in f32.
    h = jnp.dot(xn_ref[...], w1_ref[...],
                preferred_element_type=jnp.float32) + b1_ref[...]
    h = jnp.maximum(h, 0.0)
    acc_ref[...] += jnp.dot(h.astype(jnp.bfloat16), w2_ref[...],
                            preferred_element_type=jnp.float32)

    @pl.when(k == pl.num_programs(1) - 1)
    def _():
        o_ref[...] = acc_ref[...].astype(o_ref.dtype)


def _block_spec(shape, index_map, *, single_buffer=False):
    """BlockSpec; grid-invariant operands get a single VMEM buffer."""
    if single_buffer and hasattr(pl, "Buffered"):
        try:
            return pl.BlockSpec(shape, index_map, pipeline_mode=pl.Buffered(1))
        except TypeError:   # older jax without pipeline_mode kwarg
            pass
    return pl.BlockSpec(shape, index_map)


@functools.partial(jax.jit, static_argnames=("tm",))
def resffnet_forward(x, gamma, beta, w1, b1, w2, b2, *, tm=512):
    """x: (B, T, C) float32. Returns (B, T, C)."""
    B, T, C = x.shape
    H = w1.shape[1]
    M = B * T

    # Row tile: full tm (multiple of the 256-tall MXU) when M is large; a single
    # 8-aligned tile covering all rows for genuinely small M.
    tm_eff = tm if M >= tm else _round_up(M, 8)
    M_pad = _round_up(M, tm_eff)

    x2d = x.reshape(M, C)
    if M_pad != M:
        # Padded rows are garbage-but-finite through LayerNorm and are sliced off.
        x2d = jnp.pad(x2d, ((0, M_pad - M), (0, 0)))

    # Hidden-dim chunking: bounded chunk, H zero-padded up to a multiple of it.
    hc = _pick_h_chunk(H)
    H_pad = _round_up(H, hc)
    n_h_chunks = H_pad // hc
    if H_pad != H:
        w1 = jnp.pad(w1, ((0, 0), (0, H_pad - H)))
        b1 = jnp.pad(b1, ((0, 0), (0, H_pad - H)))
        w2 = jnp.pad(w2, ((0, H_pad - H), (0, 0)))   # zero rows -> no contribution

    # bf16 weights: native MXU rate, half the VMEM / DMA bytes.
    w1_bf = w1.astype(jnp.bfloat16)
    w2_bf = w2.astype(jnp.bfloat16)

    # Weights only need double-buffering when they are actually streamed over k.
    weights_streamed = n_h_chunks > 1

    in_specs = [
        pl.BlockSpec((tm_eff, C), lambda i, k: (i, 0)),                   # x tile
        _block_spec((1, C), lambda i, k: (0, 0), single_buffer=True),     # gamma
        _block_spec((1, C), lambda i, k: (0, 0), single_buffer=True),     # beta
        _block_spec((C, hc), lambda i, k: (0, k),
                    single_buffer=not weights_streamed),                  # w1 slice
        _block_spec((1, hc), lambda i, k: (0, k),
                    single_buffer=not weights_streamed),                  # b1 slice
        _block_spec((hc, C), lambda i, k: (k, 0),
                    single_buffer=not weights_streamed),                  # w2 slice
        _block_spec((1, C), lambda i, k: (0, 0), single_buffer=True),     # b2
    ]

    # VMEM budget from actual buffer usage; cap below physical capacity so the
    # compiler keeps headroom for internal scratch (v7x has only 64 MiB per core).
    wbuf = 2 if weights_streamed else 1
    est = (2 * tm_eff * C * 4 * 2                       # x + out tiles, 2-deep
           + tm_eff * C * 4                             # f32 accumulator scratch
           + tm_eff * C * 2                             # bf16 LayerNorm scratch
           + tm_eff * hc * 4                            # fc1 chunk intermediate
           + wbuf * (2 * C * hc * 2 + hc * 4)           # w1/w2/b1 buffers
           + 3 * C * 4)                                 # gamma / beta / b2
    try:
        vmem_cap = pltpu.get_tpu_info().vmem_capacity_bytes
    except Exception:
        vmem_cap = 64 << 20
    vmem_limit = int(min(max(2 * est, 32 << 20), (vmem_cap * 7) // 8))

    out2d = pl.pallas_call(
        _resffnet_kernel,
        out_shape=jax.ShapeDtypeStruct((M_pad, C), x.dtype),
        grid_spec=pltpu.PrefetchScalarGridSpec(
            num_scalar_prefetch=0,
            grid=(M_pad // tm_eff, n_h_chunks),
            in_specs=in_specs,
            out_specs=pl.BlockSpec((tm_eff, C), lambda i, k: (i, 0)),
            scratch_shapes=[pltpu.VMEM((tm_eff, C), jnp.float32),     # accumulator
                            pltpu.VMEM((tm_eff, C), jnp.bfloat16)],   # LN output
        ),
        compiler_params=pltpu.CompilerParams(
            dimension_semantics=("parallel", "arbitrary"),
            vmem_limit_bytes=vmem_limit,
        ),
    )(x2d, gamma, beta, w1_bf, b1, w2_bf, b2)

    if M_pad != M:
        out2d = out2d[:M]
    return out2d.reshape(B, T, C)


def init_params(key, n_emb, exp_fac=4):
    """Deterministic synthetic parameter init (matches PyTorch module shapes)."""
    hidden = exp_fac * n_emb
    k1, k2, k3, k4 = jax.random.split(key, 4)
    # nn.Linear stores (out, in); we keep (in, out) for the kernel matmuls.
    w1 = (jax.random.normal(k1, (n_emb, hidden), jnp.float32)
          * (1.0 / jnp.sqrt(n_emb)))
    b1 = jax.random.normal(k2, (1, hidden), jnp.float32) * 0.01
    w2 = (jax.random.normal(k3, (hidden, n_emb), jnp.float32)
          * (1.0 / jnp.sqrt(hidden)))
    b2 = jax.random.normal(k4, (1, n_emb), jnp.float32) * 0.01
    gamma = jnp.ones((1, n_emb), jnp.float32)   # BIALayerNorm weight
    beta = jnp.zeros((1, n_emb), jnp.float32)   # BIALayerNorm bias
    return gamma, beta, w1, b1, w2, b2


def _reference(x, gamma, beta, w1, b1, w2, b2):
    """Pure-JAX reference mirroring the kernel's bf16-matmul / f32-accumulate math.

    Accepted bf16 tradeoff vs a true f32 PyTorch ResFFNet: atol/rtol 1e-2.
    """
    xf = x.astype(jnp.float32)
    mu = jnp.mean(xf, axis=-1, keepdims=True)
    var = jnp.mean((xf - mu) ** 2, axis=-1, keepdims=True)
    xn = (xf - mu) * lax.rsqrt(var + 1e-5) * gamma[0] + beta[0]
    h = jnp.dot(xn.astype(jnp.bfloat16), w1.astype(jnp.bfloat16),
                preferred_element_type=jnp.float32) + b1[0]
    h = jnp.maximum(h, 0.0)
    y = jnp.dot(h.astype(jnp.bfloat16), w2.astype(jnp.bfloat16),
                preferred_element_type=jnp.float32) + b2[0]
    # TODO(synk): nn.Dropout with d_rate > 0 not implemented (module default 0.0 -> identity).
    return (y + xf).astype(x.dtype)


if __name__ == "__main__":
    key = jax.random.PRNGKey(0)

    # Config 1: small lane-aligned shapes, single H chunk (resident weights path).
    # Config 2: exp_fac=5 -> H=640 > 512: exercises the streamed-weight k axis,
    #           H zero-padding and cross-grid-step accumulation.
    configs = [
        dict(B=2, T=8, n_emb=128, exp_fac=4),
        dict(B=2, T=16, n_emb=128, exp_fac=5),
    ]

    for cfg in configs:
        kx, kp, key = jax.random.split(key, 3)
        B, T, n_emb, exp_fac = cfg["B"], cfg["T"], cfg["n_emb"], cfg["exp_fac"]
        x = jax.random.normal(kx, (B, T, n_emb), jnp.float32)
        params = init_params(kp, n_emb, exp_fac)

        out = resffnet_forward(x, *params)
        out = jax.block_until_ready(out)

        ref = _reference(x, *params)
        assert out.shape == (B, T, n_emb)
        assert jnp.allclose(out, ref, atol=1e-2, rtol=1e-2), (
            f"mismatch vs reference for cfg={cfg}")

    print("KERNEL_OK")
</pallas_src>

<mosaic_0001>
module attributes {stable_mosaic.version = 11 : i64} {
  func.func @_resffnet_kernel(%arg0: i32, %arg1: i32, %arg2: memref<16x128xf32, #tpu.memory_space<vmem>>, %arg3: memref<1x128xf32, #tpu.memory_space<vmem>>, %arg4: memref<1x128xf32, #tpu.memory_space<vmem>>, %arg5: memref<128x512xbf16, #tpu.memory_space<vmem>>, %arg6: memref<1x512xf32, #tpu.memory_space<vmem>>, %arg7: memref<512x128xbf16, #tpu.memory_space<vmem>>, %arg8: memref<1x128xf32, #tpu.memory_space<vmem>>, %arg9: memref<16x128xf32, #tpu.memory_space<vmem>>, %arg10: memref<16x128xf32, #tpu.memory_space<vmem>>, %arg11: memref<16x128xbf16, #tpu.memory_space<vmem>>) attributes {dimension_semantics = [#tpu.dimension_semantics<parallel>, #tpu.dimension_semantics<arbitrary>], iteration_bounds = array<i64: 1, 1>, scalar_prefetch = 0 : i64, scratch_operands = 2 : i64, tpu.core_type = #tpu.core_type<tc>, window_params = [{transform_indices = @transform_0, window_bounds = array<i64: 16, 128>}, {pipeline_mode = #tpu.pipeline_mode<synchronous>, transform_indices = @transform_1, window_bounds = array<i64: 1, 128>}, {pipeline_mode = #tpu.pipeline_mode<synchronous>, transform_indices = @transform_2, window_bounds = array<i64: 1, 128>}, {pipeline_mode = #tpu.pipeline_mode<synchronous>, transform_indices = @transform_3, window_bounds = array<i64: 128, 512>}, {pipeline_mode = #tpu.pipeline_mode<synchronous>, transform_indices = @transform_4, window_bounds = array<i64: 1, 512>}, {pipeline_mode = #tpu.pipeline_mode<synchronous>, transform_indices = @transform_5, window_bounds = array<i64: 512, 128>}, {pipeline_mode = #tpu.pipeline_mode<synchronous>, transform_indices = @transform_6, window_bounds = array<i64: 1, 128>}, {transform_indices = @transform_7, window_bounds = array<i64: 16, 128>}]} {
    %c0_i32 = arith.constant 0 : i32
    %0 = arith.cmpi eq, %arg1, %c0_i32 : i32
    %1 = arith.extui %0 : i1 to i32
    %c0_i32_0 = arith.constant 0 : i32
    %2 = arith.cmpi ne, %1, %c0_i32_0 : i32
    scf.if %2 {
      %c0_16 = arith.constant 0 : index
      %c0_17 = arith.constant 0 : index
      %20 = vector.load %arg2[%c0_16, %c0_17] : memref<16x128xf32, #tpu.memory_space<vmem>>, vector<16x128xf32>
      %cst_18 = arith.constant dense<0.000000e+00> : vector<16xf32>
      %21 = vector.multi_reduction <add>, %20, %cst_18 [1] : vector<16x128xf32> to vector<16xf32>
      %22 = vector.shape_cast %21 : vector<16xf32> to vector<16x1xf32>
      %cst_19 = arith.constant 1.280000e+02 : f32
      %23 = vector.broadcast %cst_19 : f32 to vector<16x1xf32>
      %24 = arith.divf %22, %23 : vector<16x1xf32>
      %25 = vector.broadcast %24 : vector<16x1xf32> to vector<16x128xf32>
      %26 = arith.subf %20, %25 : vector<16x128xf32>
      %27 = arith.mulf %26, %26 : vector<16x128xf32>
      %cst_20 = arith.constant dense<0.000000e+00> : vector<16xf32>
      %28 = vector.multi_reduction <add>, %27, %cst_20 [1] : vector<16x128xf32> to vector<16xf32>
      %29 = vector.shape_cast %28 : vector<16xf32> to vector<16x1xf32>
      %cst_21 = arith.constant 1.280000e+02 : f32
      %30 = vector.broadcast %cst_21 : f32 to vector<16x1xf32>
      %31 = arith.divf %29, %30 : vector<16x1xf32>
      %cst_22 = arith.constant 9.99999974E-6 : f32
      %32 = vector.broadcast %cst_22 : f32 to vector<16x1xf32>
      %33 = arith.addf %31, %32 : vector<16x1xf32>
      %34 = math.rsqrt %33 : vector<16x1xf32>
      %35 = vector.broadcast %34 : vector<16x1xf32> to vector<16x128xf32>
      %36 = arith.mulf %26, %35 : vector<16x128xf32>
      %c0_23 = arith.constant 0 : index
      %c0_24 = arith.constant 0 : index
      %37 = vector.load %arg3[%c0_23, %c0_24] : memref<1x128xf32, #tpu.memory_space<vmem>>, vector<1x128xf32>
      %38 = vector.broadcast %37 : vector<1x128xf32> to vector<16x128xf32>
      %39 = arith.mulf %36, %38 : vector<16x128xf32>
      %c0_25 = arith.constant 0 : index
      %c0_26 = arith.constant 0 : index
      %40 = vector.load %arg4[%c0_25, %c0_26] : memref<1x128xf32, #tpu.memory_space<vmem>>, vector<1x128xf32>
      %41 = vector.broadcast %40 : vector<1x128xf32> to vector<16x128xf32>
      %42 = arith.addf %39, %41 : vector<16x128xf32>
      %43 = arith.truncf %42 : vector<16x128xf32> to vector<16x128xbf16>
      %c0_27 = arith.constant 0 : index
      %c0_28 = arith.constant 0 : index
      %44 = vector.load %arg11[%c0_27, %c0_28] : memref<16x128xbf16, #tpu.memory_space<vmem>>, vector<16x128xbf16>
      tpu.vector_store %arg11[%c0_27, %c0_28], %43 {strides = array<i32>} : memref<16x128xbf16, #tpu.memory_space<vmem>>, vector<16x128xbf16>,
      %c0_29 = arith.constant 0 : index
      %c0_30 = arith.constant 0 : index
      %45 = vector.load %arg8[%c0_29, %c0_30] : memref<1x128xf32, #tpu.memory_space<vmem>>, vector<1x128xf32>
      %46 = vector.broadcast %45 : vector<1x128xf32> to vector<16x128xf32>
      %47 = arith.addf %20, %46 : vector<16x128xf32>
      %c0_31 = arith.constant 0 : index
      %c0_32 = arith.constant 0 : index
      %48 = vector.load %arg10[%c0_31, %c0_32] : memref<16x128xf32, #tpu.memory_space<vmem>>, vector<16x128xf32>
      tpu.vector_store %arg10[%c0_31, %c0_32], %47 {strides = array<i32>} : memref<16x128xf32, #tpu.memory_space<vmem>>, vector<16x128xf32>,
    } else {
    }
    %c0 = arith.constant 0 : index
    %c0_1 = arith.constant 0 : index
    %3 = vector.load %arg11[%c0, %c0_1] : memref<16x128xbf16, #tpu.memory_space<vmem>>, vector<16x128xbf16>
    %c0_2 = arith.constant 0 : index
    %c0_3 = arith.constant 0 : index
    %4 = vector.load %arg5[%c0_2, %c0_3] : memref<128x512xbf16, #tpu.memory_space<vmem>>, vector<128x512xbf16>
    %cst = arith.constant dense<0.000000e+00> : vector<16x512xf32>
    %5 = tpu.matmul %3, %4, %cst {dimension_numbers = #tpu.dot_dimension_numbers<[1], [0], [0], [1], [0, 0, 1, 1], [], []>} : vector<16x128xbf16>, vector<128x512xbf16>, vector<16x512xf32> -> vector<16x512xf32>
    %c0_4 = arith.constant 0 : index
    %c0_5 = arith.constant 0 : index
    %6 = vector.load %arg6[%c0_4, %c0_5] : memref<1x512xf32, #tpu.memory_space<vmem>>, vector<1x512xf32>
    %7 = vector.broadcast %6 : vector<1x512xf32> to vector<16x512xf32>
    %8 = arith.addf %5, %7 : vector<16x512xf32>
    %cst_6 = arith.constant 0.000000e+00 : f32
    %9 = vector.broadcast %cst_6 : f32 to vector<16x512xf32>
    %10 = arith.maximumf %8, %9 : vector<16x512xf32>
    %c0_7 = arith.constant 0 : index
    %c0_8 = arith.constant 0 : index
    %11 = vector.load %arg10[%c0_7, %c0_8] : memref<16x128xf32, #tpu.memory_space<vmem>>, vector<16x128xf32>
    %12 = arith.truncf %10 : vector<16x512xf32> to vector<16x512xbf16>
    %c0_9 = arith.constant 0 : index
    %c0_10 = arith.constant 0 : index
    %13 = vector.load %arg7[%c0_9, %c0_10] : memref<512x128xbf16, #tpu.memory_space<vmem>>, vector<512x128xbf16>
    %cst_11 = arith.constant dense<0.000000e+00> : vector<16x128xf32>
    %14 = tpu.matmul %12, %13, %cst_11 {dimension_numbers = #tpu.dot_dimension_numbers<[1], [0], [0], [1], [0, 0, 1, 1], [], []>} : vector<16x512xbf16>, vector<512x128xbf16>, vector<16x128xf32> -> vector<16x128xf32>
    %15 = arith.addf %11, %14 : vector<16x128xf32>
    %c0_12 = arith.constant 0 : index
    %c0_13 = arith.constant 0 : index
    %16 = vector.load %arg10[%c0_12, %c0_13] : memref<16x128xf32, #tpu.memory_space<vmem>>, vector<16x128xf32>
    tpu.vector_store %arg10[%c0_12, %c0_13], %15 {strides = array<i32>} : memref<16x128xf32, #tpu.memory_space<vmem>>, vector<16x128xf32>,
    %c0_i32_14 = arith.constant 0 : i32
    %17 = arith.cmpi eq, %arg1, %c0_i32_14 : i32
    %18 = arith.extui %17 : i1 to i32
    %c0_i32_15 = arith.constant 0 : i32
    %19 = arith.cmpi ne, %18, %c0_i32_15 : i32
    scf.if %19 {
      %c0_16 = arith.constant 0 : index
      %c0_17 = arith.constant 0 : index
      %20 = vector.load %arg10[%c0_16, %c0_17] : memref<16x128xf32, #tpu.memory_space<vmem>>, vector<16x128xf32>
      %c0_18 = arith.constant 0 : index
      %c0_19 = arith.constant 0 : index
      %21 = vector.load %arg9[%c0_18, %c0_19] : memref<16x128xf32, #tpu.memory_space<vmem>>, vector<16x128xf32>
      tpu.vector_store %arg9[%c0_18, %c0_19], %20 {strides = array<i32>} : memref<16x128xf32, #tpu.memory_space<vmem>>, vector<16x128xf32>,
    } else {
    }
    return
  }
  func.func @transform_0(%arg0: i32, %arg1: i32) -> (i32, i32) {
    %c0_i32 = arith.constant 0 : i32
    %c0_i32_0 = arith.constant 0 : i32
    return %arg0, %c0_i32 : i32, i32
  }
  func.func @transform_1(%arg0: i32, %arg1: i32) -> (i32, i32) {
    %c0_i32 = arith.constant 0 : i32
    %c0_i32_0 = arith.constant 0 : i32
    %c0_i32_1 = arith.constant 0 : i32
    return %c0_i32, %c0_i32_0 : i32, i32
  }
  func.func @transform_2(%arg0: i32, %arg1: i32) -> (i32, i32) {
    %c0_i32 = arith.constant 0 : i32
    %c0_i32_0 = arith.constant 0 : i32
    %c0_i32_1 = arith.constant 0 : i32
    return %c0_i32, %c0_i32_0 : i32, i32
  }
  func.func @transform_3(%arg0: i32, %arg1: i32) -> (i32, i32) {
    %c0_i32 = arith.constant 0 : i32
    %c0_i32_0 = arith.constant 0 : i32
    return %c0_i32, %arg1 : i32, i32
  }
  func.func @transform_4(%arg0: i32, %arg1: i32) -> (i32, i32) {
    %c0_i32 = arith.constant 0 : i32
    %c0_i32_0 = arith.constant 0 : i32
    return %c0_i32, %arg1 : i32, i32
  }
  func.func @transform_5(%arg0: i32, %arg1: i32) -> (i32, i32) {
    %c0_i32 = arith.constant 0 : i32
    %c0_i32_0 = arith.constant 0 : i32
    return %arg1, %c0_i32 : i32, i32
  }
  func.func @transform_6(%arg0: i32, %arg1: i32) -> (i32, i32) {
    %c0_i32 = arith.constant 0 : i32
    %c0_i32_0 = arith.constant 0 : i32
    %c0_i32_1 = arith.constant 0 : i32
    return %c0_i32, %c0_i32_0 : i32, i32
  }
  func.func @transform_7(%arg0: i32, %arg1: i32) -> (i32, i32) {
    %c0_i32 = arith.constant 0 : i32
    %c0_i32_0 = arith.constant 0 : i32
    return %arg0, %c0_i32 : i32, i32
  }
}

</mosaic_0001>

<llo_original>
// kernel: resffnet_forward.1
$region0: #{resffnet_forward.1}
  #allocation0 [shape = 'u32[]', space=smem, size = 0x4, offset = 0x4, fixed_abs, tag = 'smem constant byte address 0x4 - core index']
  #allocation1 [shape = 'u32[72,128]{1,0:T(1,128)}', space=vmem, size = 0x9000, scoped, tag = 'internal scratch']
  #allocation2 [shape = 'f32[16,128]{1,0:T(8,128)}', space=vmem, size = 0x2000, scoped, tag = 'scratch operand']
  #allocation3 [shape = 'bf16[16,128]{1,0:T(8,128)(2,1)}', space=vmem, size = 0x1000, scoped, tag = 'scratch operand']
  %s0 = inlined_call_operand.vmem [shape: f32[16,128], index: 0, kind: input, shape index: {}]
  %s1 = inlined_call_operand.vmem [shape: f32[1,128], index: 1, kind: input, shape index: {}]
  %s2 = inlined_call_operand.vmem [shape: f32[1,128], index: 2, kind: input, shape index: {}]
  %s3 = inlined_call_operand.vmem [shape: bf16[128,512], index: 3, kind: input, shape index: {}]
  %s4 = inlined_call_operand.vmem [shape: f32[1,512], index: 4, kind: input, shape index: {}]
  %s5 = inlined_call_operand.vmem [shape: bf16[512,128], index: 5, kind: input, shape index: {}]
  %s6 = inlined_call_operand.vmem [shape: f32[1,128], index: 6, kind: input, shape index: {}]
  %s7 = inlined_call_operand.hbm [shape: f32[16,128], index: 7, kind: output, shape index: {}]
  %s8 = sld [smem:[#allocation0]]
  $region46: #{resffnet_forward.1} parent=0
    _
  %s10 = ssub.s32 1, %s8
  %s11 = scalar_select 0, %s10, %s8
  $region1: #{resffnet_forward.1} parent=0
    #allocation4 [shape = 'u8[8192]{0}', space=vmem, size = 0x2000, scoped, tag = 'output window, operand 0, single buffered']
    #allocation5 [shape = 's32[1]{0}', space=sflag, size = 0x4, scoped, tag = 'scoped memory for resffnet_forward.1']
    %12 = vsyncpa [#allocation5], 0
    // Predicated region
    $region2: #{resffnet_forward.1} parent=1 // pred_check
      _
    $region3: #{resffnet_forward.1} parent=1 // pred_check_branch
      %14 = sbr.rel (0) target = $region5
    $region4: #{resffnet_forward.1} parent=1 // pred_region
      _
    $region5: #{resffnet_forward.1} parent=1 // pred_fallthru
      _
    // Predicated region
    $region6: #{resffnet_forward.1} parent=1 // pred_check
      _
    $region7: #{resffnet_forward.1} parent=1 // pred_check_branch
      %16 = sbr.rel (0) target = $region9
    $region8: #{resffnet_forward.1} parent=1 // pred_region
      _
    $region9: #{resffnet_forward.1} parent=1 // pred_fallthru
      _
    // Predicated region
    $region10: #{resffnet_forward.1} parent=1 // pred_check
      _
    $region11: #{resffnet_forward.1} parent=1 // pred_check_branch
      %18 = sbr.rel (0) target = $region13
    $region12: #{resffnet_forward.1} parent=1 // pred_region
      _
    $region13: #{resffnet_forward.1} parent=1 // pred_fallthru
      _
    // Predicated region
    $region14: #{resffnet_forward.1} parent=1 // pred_check
      _
    $region15: #{resffnet_forward.1} parent=1 // pred_check_branch
      %20 = sbr.rel (0) target = $region17
    $region16: #{resffnet_forward.1} parent=1 // pred_region
      _
    $region17: #{resffnet_forward.1} parent=1 // pred_fallthru
      _
    // Predicated region
    $region18: #{resffnet_forward.1} parent=1 // pred_check
      _
    $region19: #{resffnet_forward.1} parent=1 // pred_check_branch
      %22 = sbr.rel (0) target = $region21
    $region20: #{resffnet_forward.1} parent=1 // pred_region
      _
    $region21: #{resffnet_forward.1} parent=1 // pred_fallthru
      _
    // Predicated region
    $region22: #{resffnet_forward.1} parent=1 // pred_check
      _
    $region23: #{resffnet_forward.1} parent=1 // pred_check_branch
      %24 = sbr.rel (0) target = $region25
    $region24: #{resffnet_forward.1} parent=1 // pred_region
      _
    $region25: #{resffnet_forward.1} parent=1 // pred_fallthru
      _
    // Predicated region
    $region26: #{resffnet_forward.1} parent=1 // pred_check
      _
    $region27: #{resffnet_forward.1} parent=1 // pred_check_branch
      %26 = sbr.rel (0) target = $region29
    $region28: #{resffnet_forward.1} parent=1 // pred_region
      _
    $region29: #{resffnet_forward.1} parent=1 // pred_fallthru
      _
    %p27 = scmp.eq.s32.totalorder 0, 0
    // Predicated region
    $region30: #{resffnet_forward.1} parent=1 // pred_check
      %p28 = pneg %p27
    $region31: #{resffnet_forward.1} parent=1 // pred_check_branch
      %30 = sbr.rel (%p28) target = $region33
    $region32: #{resffnet_forward.1} parent=1 // pred_region
      %v31 = vld [vmem:[%s0] sm:$0xff]
      %v32 = vld [vmem:[%s0 + $0x8] sm:$0xff]
      %33 = vadd.xlane.f32.xlu0 %v31
      %v34 = vpop.xlane.xlu0 %33
      %35 = vadd.xlane.f32.xlu0 %v32
      %v36 = vpop.xlane.xlu0 %35
      %v37 = vrcp.pop 128.0
      %v38 = vmul.f32 128.0, %v37
      %v39 = vsub.f32 1.0, %v38
      %v40 = vmul.f32 %v37, %v39
      %v41 = vadd.f32 %v37, %v40
      %vm42 = vweird.f32 %v37
      %v43 = vsel %vm42, %v37, %v41
      %v44 = vmul.f32 %v34, %v43
      %v45 = vmul.f32 %v36, %v43
      %v46 = vsub.f32 %v31, %v44
      %v47 = vsub.f32 %v32, %v45
      %v48 = vmul.f32 %v46, %v46
      %v49 = vmul.f32 %v47, %v47
      %50 = vadd.xlane.f32.xlu0 %v48
      %v51 = vpop.xlane.xlu0 %50
      %52 = vadd.xlane.f32.xlu0 %v49
      %v53 = vpop.xlane.xlu0 %52
      %v54 = vmul.f32 %v51, %v43
      %v55 = vmul.f32 %v53, %v43
      %v56 = vadd.f32 %v54, 1e-05
      %v57 = vadd.f32 %v55, 1e-05
      %v58 = vrsqrt.pop %v56
      %v59 = vmul.f32 %v58, %v56
      %v60 = vmul.f32 %v59, %v58
      %v61 = vmul.f32 0.5, %v60
      %v62 = vsub.f32 1.5, %v61
      %v63 = vmul.f32 %v58, %v62
      %vm64 = vweird.f32 %v56
      %vm65 = vweird.f32 %v58
      %vm66 = vmor %vm64, %vm65
      %v67 = vsel %vm66, %v58, %v63
      %v68 = vrsqrt.pop %v57
      %v69 = vmul.f32 %v68, %v57
      %v70 = vmul.f32 %v69, %v68
      %v71 = vmul.f32 0.5, %v70
      %v72 = vsub.f32 1.5, %v71
      %v73 = vmul.f32 %v68, %v72
      %vm74 = vweird.f32 %v57
      %vm75 = vweird.f32 %v68
      %vm76 = vmor %vm74, %vm75
      %v77 = vsel %vm76, %v68, %v73
      %v78 = vmul.f32 %v46, %v67
      %v79 = vmul.f32 %v47, %v77
      %v80 = vld [vmem:[%s1] sm:$0x1]
      %v82 = vperm.slane %v80, 0
      %v84 = vmul.f32 %v78, %v82
      %v85 = vmul.f32 %v79, %v82
      %v86 = vld [vmem:[%s2] sm:$0x1]
      %v88 = vperm.slane %v86, 0
      %v90 = vadd.f32 %v84, %v88
      %v91 = vadd.f32 %v85, %v88
      %v92 = vpack.c.bf16 %v90, %v90
      %v93 = vpack.c.bf16 %v91, %v91
      %94 = vst [vmem:[#allocation3] sm:$0xf] %v92
      %95 = vst [vmem:[#allocation3 + $0x4] sm:$0xf] %v93
      %v96 = vld [vmem:[%s6] sm:$0x1]
      %v98 = vperm.slane %v96, 0
      %v100 = vadd.f32 %v31, %v98
      %v101 = vadd.f32 %v32, %v98
      %102 = vst [vmem:[#allocation2] sm:$0xff] %v100
      %103 = vst [vmem:[#allocation2 + $0x8] sm:$0xff] %v101
    $region33: #{resffnet_forward.1} parent=1 // pred_fallthru
      _
    %v104 = vld [vmem:[#allocation3] sm:$0xf]
    %v105 = vld [vmem:[#allocation3 + $0x4] sm:$0xf]
    %v106 = vld [vmem:[%s3] sm:$0xff]
    %v107 = vld [vmem:[%s3 + $0x8] sm:$0xff]
    %v108 = vld [vmem:[%s3 + $0x10] sm:$0xff]
    %v109 = vld [vmem:[%s3 + $0x18] sm:$0xff]
    %v110 = vld [vmem:[%s3 + $0x20] sm:$0xff]
    %v111 = vld [vmem:[%s3 + $0x28] sm:$0xff]
    %v112 = vld [vmem:[%s3 + $0x30] sm:$0xff]
    %v113 = vld [vmem:[%s3 + $0x38] sm:$0xff]
    %v114 = vld [vmem:[%s3 + $0x40] sm:$0xff]
    %v115 = vld [vmem:[%s3 + $0x48] sm:$0xff]
    %v116 = vld [vmem:[%s3 + $0x50] sm:$0xff]
    %v117 = vld [vmem:[%s3 + $0x58] sm:$0xff]
    %v118 = vld [vmem:[%s3 + $0x60] sm:$0xff]
    %v119 = vld [vmem:[%s3 + $0x68] sm:$0xff]
    %v120 = vld [vmem:[%s3 + $0x70] sm:$0xff]
    %v121 = vld [vmem:[%s3 + $0x78] sm:$0xff]
    %v122 = vld [vmem:[%s3 + $0x80] sm:$0xff]
    %v123 = vld [vmem:[%s3 + $0x88] sm:$0xff]
    %v124 = vld [vmem:[%s3 + $0x90] sm:$0xff]
    %v125 = vld [vmem:[%s3 + $0x98] sm:$0xff]
    %v126 = vld [vmem:[%s3 + $0xa0] sm:$0xff]
    %v127 = vld [vmem:[%s3 + $0xa8] sm:$0xff]
    %v128 = vld [vmem:[%s3 + $0xb0] sm:$0xff]
    %v129 = vld [vmem:[%s3 + $0xb8] sm:$0xff]
    %v130 = vld [vmem:[%s3 + $0xc0] sm:$0xff]
    %v131 = vld [vmem:[%s3 + $0xc8] sm:$0xff]
    %v132 = vld [vmem:[%s3 + $0xd0] sm:$0xff]
    %v133 = vld [vmem:[%s3 + $0xd8] sm:$0xff]
    %v134 = vld [vmem:[%s3 + $0xe0] sm:$0xff]
    %v135 = vld [vmem:[%s3 + $0xe8] sm:$0xff]
    %v136 = vld [vmem:[%s3 + $0xf0] sm:$0xff]
    %v137 = vld [vmem:[%s3 + $0xf8] sm:$0xff]
    %v138 = vld [vmem:[%s4] sm:$0xf]
    %v140 = vperm.slane %v138, 0
    %v141 = vperm.slane %v138, 1
    %v142 = vperm.slane %v138, 2
    %v143 = vperm.slane %v138, 3
    %v150 = vunpack.c.l.b16 %v104
    %v151 = vunpack.c.l.b16 %v105
    %v152 = vpack.c.b16 %v151, %v150
    %v186 = vunpack.c.l.b16 %v106
    %v187 = vunpack.c.h.b16 %v106
    %v188 = vunpack.c.l.b16 %v107
    %v189 = vunpack.c.h.b16 %v107
    %v190 = vunpack.c.l.b16 %v108
    %v191 = vunpack.c.h.b16 %v108
    %v192 = vunpack.c.l.b16 %v109
    %v193 = vunpack.c.h.b16 %v109
    %v194 = vunpack.c.l.b16 %v110
    %v195 = vunpack.c.h.b16 %v110
    %v196 = vunpack.c.l.b16 %v111
    %v197 = vunpack.c.h.b16 %v111
    %v198 = vunpack.c.l.b16 %v112
    %v199 = vunpack.c.h.b16 %v112
    %v200 = vunpack.c.l.b16 %v113
    %v201 = vunpack.c.h.b16 %v113
    %v202 = vunpack.c.l.b16 %v114
    %v203 = vunpack.c.h.b16 %v114
    %v204 = vunpack.c.l.b16 %v115
    %v205 = vunpack.c.h.b16 %v115
    %v206 = vunpack.c.l.b16 %v116
    %v207 = vunpack.c.h.b16 %v116
    %v208 = vunpack.c.l.b16 %v117
    %v209 = vunpack.c.h.b16 %v117
    %v210 = vunpack.c.l.b16 %v118
    %v211 = vunpack.c.h.b16 %v118
    %v212 = vunpack.c.l.b16 %v119
    %v213 = vunpack.c.h.b16 %v119
    %v214 = vunpack.c.l.b16 %v120
    %v215 = vunpack.c.h.b16 %v120
    %v216 = vunpack.c.l.b16 %v121
    %v217 = vunpack.c.h.b16 %v121
    %v218 = vunpack.c.l.b16 %v122
    %v219 = vunpack.c.h.b16 %v122
    %v220 = vunpack.c.l.b16 %v123
    %v221 = vunpack.c.h.b16 %v123
    %v222 = vunpack.c.l.b16 %v124
    %v223 = vunpack.c.h.b16 %v124
    %v224 = vunpack.c.l.b16 %v125
    %v225 = vunpack.c.h.b16 %v125
    %v226 = vunpack.c.l.b16 %v126
    %v227 = vunpack.c.h.b16 %v126
    %v228 = vunpack.c.l.b16 %v127
    %v229 = vunpack.c.h.b16 %v127
    %v230 = vunpack.c.l.b16 %v128
    %v231 = vunpack.c.h.b16 %v128
    %v232 = vunpack.c.l.b16 %v129
    %v233 = vunpack.c.h.b16 %v129
    %v234 = vunpack.c.l.b16 %v130
    %v235 = vunpack.c.h.b16 %v130
    %v236 = vunpack.c.l.b16 %v131
    %v237 = vunpack.c.h.b16 %v131
    %v238 = vunpack.c.l.b16 %v132
    %v239 = vunpack.c.h.b16 %v132
    %v240 = vunpack.c.l.b16 %v133
    %v241 = vunpack.c.h.b16 %v133
    %v242 = vunpack.c.l.b16 %v134
    %v243 = vunpack.c.h.b16 %v134
    %v244 = vunpack.c.l.b16 %v135
    %v245 = vunpack.c.h.b16 %v135
    %v246 = vunpack.c.l.b16 %v136
    %v247 = vunpack.c.h.b16 %v136
    %v248 = vunpack.c.l.b16 %v137
    %v249 = vunpack.c.h.b16 %v137
    %v250 = vpack.c.b16 %v190, %v186
    %v251 = vpack.c.b16 %v191, %v187
    %v252 = vpack.c.b16 %v192, %v188
    %v253 = vpack.c.b16 %v193, %v189
    %v254 = vpack.c.b16 %v198, %v194
    %v255 = vpack.c.b16 %v199, %v195
    %v256 = vpack.c.b16 %v200, %v196
    %v257 = vpack.c.b16 %v201, %v197
    %v258 = vpack.c.b16 %v206, %v202
    %v259 = vpack.c.b16 %v207, %v203
    %v260 = vpack.c.b16 %v208, %v204
    %v261 = vpack.c.b16 %v209, %v205
    %v262 = vpack.c.b16 %v214, %v210
    %v263 = vpack.c.b16 %v215, %v211
    %v264 = vpack.c.b16 %v216, %v212
    %v265 = vpack.c.b16 %v217, %v213
    %v266 = vpack.c.b16 %v222, %v218
    %v267 = vpack.c.b16 %v223, %v219
    %v268 = vpack.c.b16 %v224, %v220
    %v269 = vpack.c.b16 %v225, %v221
    %v270 = vpack.c.b16 %v230, %v226
    %v271 = vpack.c.b16 %v231, %v227
    %v272 = vpack.c.b16 %v232, %v228
    %v273 = vpack.c.b16 %v233, %v229
    %v274 = vpack.c.b16 %v238, %v234
    %v275 = vpack.c.b16 %v239, %v235
    %v276 = vpack.c.b16 %v240, %v236
    %v277 = vpack.c.b16 %v241, %v237
    %v278 = vpack.c.b16 %v246, %v242
    %v279 = vpack.c.b16 %v247, %v243
    %v280 = vpack.c.b16 %v248, %v244
    %v281 = vpack.c.b16 %v249, %v245
    %314 = vmatpush.bf16.msra.mxu0 %v278
    %315 = vmatpush.bf16.msra.mxu0 %v274
    %316 = vmatpush.bf16.msra.mxu0 %v270
    %317 = vmatpush.bf16.msra.mxu0 %v266
    %318 = vmatpush.bf16.msra.mxu0 %v262
    %319 = vmatpush.bf16.msra.mxu0 %v258
    %320 = vmatpush.bf16.msra.mxu0 %v254
    %321 = vmatpush.bf16.msra.mxu0 %v250
    %322 = vmatmul.bf16.gmra.mxu0 %v152
    %v323 = vpop.f32.mrf.mxu0
    %v324 = vadd.f32 %v140, %v323
    %v325 = vpop.f32.mrf.mxu0
    %v326 = vadd.f32 %v140, %v325
    %327 = vdwg.mxu0
    %328 = vmatpush.bf16.msra.mxu0 %v279
    %329 = vmatpush.bf16.msra.mxu0 %v275
    %330 = vmatpush.bf16.msra.mxu0 %v271
    %331 = vmatpush.bf16.msra.mxu0 %v267
    %332 = vmatpush.bf16.msra.mxu0 %v263
    %333 = vmatpush.bf16.msra.mxu0 %v259
    %334 = vmatpush.bf16.msra.mxu0 %v255
    %335 = vmatpush.bf16.msra.mxu0 %v251
    %336 = vmatmul.bf16.gmra.mxu0 %v152
    %v337 = vpop.f32.mrf.mxu0
    %v338 = vadd.f32 %v141, %v337
    %v339 = vpop.f32.mrf.mxu0
    %v340 = vadd.f32 %v141, %v339
    %341 = vdwg.mxu0
    %342 = vmatpush.bf16.msra.mxu0 %v280
    %343 = vmatpush.bf16.msra.mxu0 %v276
    %344 = vmatpush.bf16.msra.mxu0 %v272
    %345 = vmatpush.bf16.msra.mxu0 %v268
    %346 = vmatpush.bf16.msra.mxu0 %v264
    %347 = vmatpush.bf16.msra.mxu0 %v260
    %348 = vmatpush.bf16.msra.mxu0 %v256
    %349 = vmatpush.bf16.msra.mxu0 %v252
    %350 = vmatmul.bf16.gmra.mxu0 %v152
    %v351 = vpop.f32.mrf.mxu0
    %v352 = vadd.f32 %v142, %v351
    %v353 = vpop.f32.mrf.mxu0
    %v354 = vadd.f32 %v142, %v353
    %355 = vdwg.mxu0
    %356 = vmatpush.bf16.msra.mxu0 %v281
    %357 = vmatpush.bf16.msra.mxu0 %v277
    %358 = vmatpush.bf16.msra.mxu0 %v273
    %359 = vmatpush.bf16.msra.mxu0 %v269
    %360 = vmatpush.bf16.msra.mxu0 %v265
    %361 = vmatpush.bf16.msra.mxu0 %v261
    %362 = vmatpush.bf16.msra.mxu0 %v257
    %363 = vmatpush.bf16.msra.mxu0 %v253
    %364 = vmatmul.bf16.gmra.mxu0 %v152
    %v365 = vpop.f32.mrf.mxu0
    %v366 = vadd.f32 %v143, %v365
    %v367 = vpop.f32.mrf.mxu0
    %v368 = vadd.f32 %v143, %v367
    %369 = vdwg.mxu0
    %v370 = vmax.f32 %v324, 0.0
    %v371 = vmax.f32 %v338, 0.0
    %v372 = vmax.f32 %v352, 0.0
    %v373 = vmax.f32 %v366, 0.0
    %v374 = vmax.f32 %v326, 0.0
    %v375 = vmax.f32 %v340, 0.0
    %v376 = vmax.f32 %v354, 0.0
    %v377 = vmax.f32 %v368, 0.0
    %v378 = vld [vmem:[#allocation2] sm:$0xff]
    %v379 = vld [vmem:[#allocation2 + $0x8] sm:$0xff]
    %v380 = vpack.c.bf16 %v374, %v370
    %v381 = vpack.c.bf16 %v375, %v371
    %v382 = vpack.c.bf16 %v376, %v372
    %v383 = vpack.c.bf16 %v377, %v373
    %v384 = vld [vmem:[%s5] sm:$0xf]
    %v385 = vld [vmem:[%s5 + $0x4] sm:$0xf]
    %v386 = vld [vmem:[%s5 + $0x8] sm:$0xf]
    %v387 = vld [vmem:[%s5 + $0xc] sm:$0xf]
    %v388 = vld [vmem:[%s5 + $0x10] sm:$0xf]
    %v389 = vld [vmem:[%s5 + $0x14] sm:$0xf]
    %v390 = vld [vmem:[%s5 + $0x18] sm:$0xf]
    %v391 = vld [vmem:[%s5 + $0x1c] sm:$0xf]
    %v392 = vld [vmem:[%s5 + $0x20] sm:$0xf]
    %v393 = vld [vmem:[%s5 + $0x24] sm:$0xf]
    %v394 = vld [vmem:[%s5 + $0x28] sm:$0xf]
    %v395 = vld [vmem:[%s5 + $0x2c] sm:$0xf]
    %v396 = vld [vmem:[%s5 + $0x30] sm:$0xf]
    %v397 = vld [vmem:[%s5 + $0x34] sm:$0xf]
    %v398 = vld [vmem:[%s5 + $0x38] sm:$0xf]
    %v399 = vld [vmem:[%s5 + $0x3c] sm:$0xf]
    %v400 = vld [vmem:[%s5 + $0x40] sm:$0xf]
    %v401 = vld [vmem:[%s5 + $0x44] sm:$0xf]
    %v402 = vld [vmem:[%s5 + $0x48] sm:$0xf]
    %v403 = vld [vmem:[%s5 + $0x4c] sm:$0xf]
    %v404 = vld [vmem:[%s5 + $0x50] sm:$0xf]
    %v405 = vld [vmem:[%s5 + $0x54] sm:$0xf]
    %v406 = vld [vmem:[%s5 + $0x58] sm:$0xf]
    %v407 = vld [vmem:[%s5 + $0x5c] sm:$0xf]
    %v408 = vld [vmem:[%s5 + $0x60] sm:$0xf]
    %v409 = vld [vmem:[%s5 + $0x64] sm:$0xf]
    %v410 = vld [vmem:[%s5 + $0x68] sm:$0xf]
    %v411 = vld [vmem:[%s5 + $0x6c] sm:$0xf]
    %v412 = vld [vmem:[%s5 + $0x70] sm:$0xf]
    %v413 = vld [vmem:[%s5 + $0x74] sm:$0xf]
    %v414 = vld [vmem:[%s5 + $0x78] sm:$0xf]
    %v415 = vld [vmem:[%s5 + $0x7c] sm:$0xf]
    %v416 = vld [vmem:[%s5 + $0x80] sm:$0xf]
    %v417 = vld [vmem:[%s5 + $0x84] sm:$0xf]
    %v418 = vld [vmem:[%s5 + $0x88] sm:$0xf]
    %v419 = vld [vmem:[%s5 + $0x8c] sm:$0xf]
    %v420 = vld [vmem:[%s5 + $0x90] sm:$0xf]
    %v421 = vld [vmem:[%s5 + $0x94] sm:$0xf]
    %v422 = vld [vmem:[%s5 + $0x98] sm:$0xf]
    %v423 = vld [vmem:[%s5 + $0x9c] sm:$0xf]
    %v424 = vld [vmem:[%s5 + $0xa0] sm:$0xf]
    %v425 = vld [vmem:[%s5 + $0xa4] sm:$0xf]
    %v426 = vld [vmem:[%s5 + $0xa8] sm:$0xf]
    %v427 = vld [vmem:[%s5 + $0xac] sm:$0xf]
    %v428 = vld [vmem:[%s5 + $0xb0] sm:$0xf]
    %v429 = vld [vmem:[%s5 + $0xb4] sm:$0xf]
    %v430 = vld [vmem:[%s5 + $0xb8] sm:$0xf]
    %v431 = vld [vmem:[%s5 + $0xbc] sm:$0xf]
    %v432 = vld [vmem:[%s5 + $0xc0] sm:$0xf]
    %v433 = vld [vmem:[%s5 + $0xc4] sm:$0xf]
    %v434 = vld [vmem:[%s5 + $0xc8] sm:$0xf]
    %v435 = vld [vmem:[%s5 + $0xcc] sm:$0xf]
    %v436 = vld [vmem:[%s5 + $0xd0] sm:$0xf]
    %v437 = vld [vmem:[%s5 + $0xd4] sm:$0xf]
    %v438 = vld [vmem:[%s5 + $0xd8] sm:$0xf]
    %v439 = vld [vmem:[%s5 + $0xdc] sm:$0xf]
    %v440 = vld [vmem:[%s5 + $0xe0] sm:$0xf]
    %v441 = vld [vmem:[%s5 + $0xe4] sm:$0xf]
    %v442 = vld [vmem:[%s5 + $0xe8] sm:$0xf]
    %v443 = vld [vmem:[%s5 + $0xec] sm:$0xf]
    %v444 = vld [vmem:[%s5 + $0xf0] sm:$0xf]
    %v445 = vld [vmem:[%s5 + $0xf4] sm:$0xf]
    %v446 = vld [vmem:[%s5 + $0xf8] sm:$0xf]
    %v447 = vld [vmem:[%s5 + $0xfc] sm:$0xf]
    %v512 = vunpack.c.l.b16 %v384
    %v513 = vunpack.c.l.b16 %v385
    %v514 = vunpack.c.l.b16 %v386
    %v515 = vunpack.c.l.b16 %v387
    %v516 = vunpack.c.l.b16 %v388
    %v517 = vunpack.c.l.b16 %v389
    %v518 = vunpack.c.l.b16 %v390
    %v519 = vunpack.c.l.b16 %v391
    %v520 = vunpack.c.l.b16 %v392
    %v521 = vunpack.c.l.b16 %v393
    %v522 = vunpack.c.l.b16 %v394
    %v523 = vunpack.c.l.b16 %v395
    %v524 = vunpack.c.l.b16 %v396
    %v525 = vunpack.c.l.b16 %v397
    %v526 = vunpack.c.l.b16 %v398
    %v527 = vunpack.c.l.b16 %v399
    %v528 = vunpack.c.l.b16 %v400
    %v529 = vunpack.c.l.b16 %v401
    %v530 = vunpack.c.l.b16 %v402
    %v531 = vunpack.c.l.b16 %v403
    %v532 = vunpack.c.l.b16 %v404
    %v533 = vunpack.c.l.b16 %v405
    %v534 = vunpack.c.l.b16 %v406
    %v535 = vunpack.c.l.b16 %v407
    %v536 = vunpack.c.l.b16 %v408
    %v537 = vunpack.c.l.b16 %v409
    %v538 = vunpack.c.l.b16 %v410
    %v539 = vunpack.c.l.b16 %v411
    %v540 = vunpack.c.l.b16 %v412
    %v541 = vunpack.c.l.b16 %v413
    %v542 = vunpack.c.l.b16 %v414
    %v543 = vunpack.c.l.b16 %v415
    %v544 = vunpack.c.l.b16 %v416
    %v545 = vunpack.c.l.b16 %v417
    %v546 = vunpack.c.l.b16 %v418
    %v547 = vunpack.c.l.b16 %v419
    %v548 = vunpack.c.l.b16 %v420
    %v549 = vunpack.c.l.b16 %v421
    %v550 = vunpack.c.l.b16 %v422
    %v551 = vunpack.c.l.b16 %v423
    %v552 = vunpack.c.l.b16 %v424
    %v553 = vunpack.c.l.b16 %v425
    %v554 = vunpack.c.l.b16 %v426
    %v555 = vunpack.c.l.b16 %v427
    %v556 = vunpack.c.l.b16 %v428
    %v557 = vunpack.c.l.b16 %v429
    %v558 = vunpack.c.l.b16 %v430
    %v559 = vunpack.c.l.b16 %v431
    %v560 = vunpack.c.l.b16 %v432
    %v561 = vunpack.c.l.b16 %v433
    %v562 = vunpack.c.l.b16 %v434
    %v563 = vunpack.c.l.b16 %v435
    %v564 = vunpack.c.l.b16 %v436
    %v565 = vunpack.c.l.b16 %v437
    %v566 = vunpack.c.l.b16 %v438
    %v567 = vunpack.c.l.b16 %v439
    %v568 = vunpack.c.l.b16 %v440
    %v569 = vunpack.c.l.b16 %v441
    %v570 = vunpack.c.l.b16 %v442
    %v571 = vunpack.c.l.b16 %v443
    %v572 = vunpack.c.l.b16 %v444
    %v573 = vunpack.c.l.b16 %v445
    %v574 = vunpack.c.l.b16 %v446
    %v575 = vunpack.c.l.b16 %v447
    %v576 = vpack.c.b16 %v513, %v512
    %v577 = vpack.c.b16 %v515, %v514
    %v578 = vpack.c.b16 %v517, %v516
    %v579 = vpack.c.b16 %v519, %v518
    %v580 = vpack.c.b16 %v521, %v520
    %v581 = vpack.c.b16 %v523, %v522
    %v582 = vpack.c.b16 %v525, %v524
    %v583 = vpack.c.b16 %v527, %v526
    %v584 = vpack.c.b16 %v529, %v528
    %v585 = vpack.c.b16 %v531, %v530
    %v586 = vpack.c.b16 %v533, %v532
    %v587 = vpack.c.b16 %v535, %v534
    %v588 = vpack.c.b16 %v537, %v536
    %v589 = vpack.c.b16 %v539, %v538
    %v590 = vpack.c.b16 %v541, %v540
    %v591 = vpack.c.b16 %v543, %v542
    %v592 = vpack.c.b16 %v545, %v544
    %v593 = vpack.c.b16 %v547, %v546
    %v594 = vpack.c.b16 %v549, %v548
    %v595 = vpack.c.b16 %v551, %v550
    %v596 = vpack.c.b16 %v553, %v552
    %v597 = vpack.c.b16 %v555, %v554
    %v598 = vpack.c.b16 %v557, %v556
    %v599 = vpack.c.b16 %v559, %v558
    %v600 = vpack.c.b16 %v561, %v560
    %v601 = vpack.c.b16 %v563, %v562
    %v602 = vpack.c.b16 %v565, %v564
    %v603 = vpack.c.b16 %v567, %v566
    %v604 = vpack.c.b16 %v569, %v568
    %v605 = vpack.c.b16 %v571, %v570
    %v606 = vpack.c.b16 %v573, %v572
    %v607 = vpack.c.b16 %v575, %v574
    %640 = vmatpush.bf16.msra.mxu0 %v583
    %641 = vmatpush.bf16.msra.mxu0 %v582
    %642 = vmatpush.bf16.msra.mxu0 %v581
    %643 = vmatpush.bf16.msra.mxu0 %v580
    %644 = vmatpush.bf16.msra.mxu0 %v579
    %645 = vmatpush.bf16.msra.mxu0 %v578
    %646 = vmatpush.bf16.msra.mxu0 %v577
    %647 = vmatpush.bf16.msra.mxu0 %v576
    %648 = vmatmul.bf16.gmra.mxu0 %v380
    %v649 = vpop.f32.mrf.mxu0
    %v650 = vadd.f32 0.0, %v649
    %v651 = vpop.f32.mrf.mxu0
    %v652 = vadd.f32 0.0, %v651
    %653 = vdwg.mxu0
    %654 = vmatpush.bf16.msra.mxu0 %v591
    %655 = vmatpush.bf16.msra.mxu0 %v590
    %656 = vmatpush.bf16.msra.mxu0 %v589
    %657 = vmatpush.bf16.msra.mxu0 %v588
    %658 = vmatpush.bf16.msra.mxu0 %v587
    %659 = vmatpush.bf16.msra.mxu0 %v586
    %660 = vmatpush.bf16.msra.mxu0 %v585
    %661 = vmatpush.bf16.msra.mxu0 %v584
    %662 = vmatmul.bf16.gmra.mxu0 %v381
    %v663 = vpop.f32.mrf.mxu0
    %v664 = vadd.f32 %v650, %v663
    %v665 = vpop.f32.mrf.mxu0
    %v666 = vadd.f32 %v652, %v665
    %667 = vdwg.mxu0
    %668 = vmatpush.bf16.msra.mxu0 %v599
    %669 = vmatpush.bf16.msra.mxu0 %v598
    %670 = vmatpush.bf16.msra.mxu0 %v597
    %671 = vmatpush.bf16.msra.mxu0 %v596
    %672 = vmatpush.bf16.msra.mxu0 %v595
    %673 = vmatpush.bf16.msra.mxu0 %v594
    %674 = vmatpush.bf16.msra.mxu0 %v593
    %675 = vmatpush.bf16.msra.mxu0 %v592
    %676 = vmatmul.bf16.gmra.mxu0 %v382
    %v677 = vpop.f32.mrf.mxu0
    %v678 = vadd.f32 %v664, %v677
    %v679 = vpop.f32.mrf.mxu0
    %v680 = vadd.f32 %v666, %v679
    %681 = vdwg.mxu0
    %682 = vmatpush.bf16.msra.mxu0 %v607
    %683 = vmatpush.bf16.msra.mxu0 %v606
    %684 = vmatpush.bf16.msra.mxu0 %v605
    %685 = vmatpush.bf16.msra.mxu0 %v604
    %686 = vmatpush.bf16.msra.mxu0 %v603
    %687 = vmatpush.bf16.msra.mxu0 %v602
    %688 = vmatpush.bf16.msra.mxu0 %v601
    %689 = vmatpush.bf16.msra.mxu0 %v600
    %690 = vmatmul.bf16.gmra.mxu0 %v383
    %v691 = vpop.f32.mrf.mxu0
    %v692 = vadd.f32 %v678, %v691
    %v693 = vpop.f32.mrf.mxu0
    %v694 = vadd.f32 %v680, %v693
    %695 = vdwg.mxu0
    %v696 = vadd.f32 %v378, %v692
    %v697 = vadd.f32 %v379, %v694
    %698 = vst [vmem:[#allocation2] sm:$0xff] %v696
    %699 = vst [vmem:[#allocation2 + $0x8] sm:$0xff] %v697
    // Predicated region
    $region34: #{resffnet_forward.1} parent=1 // pred_check
      %p700 = pneg %p27
    $region35: #{resffnet_forward.1} parent=1 // pred_check_branch
      %702 = sbr.rel (%p700) target = $region37
    $region36: #{resffnet_forward.1} parent=1 // pred_region
      %v703 = vld [vmem:[#allocation2] sm:$0xff]
      %v704 = vld [vmem:[#allocation2 + $0x8] sm:$0xff]
      %705 = vst [vmem:[#allocation4] sm:$0xff] %v703
      %706 = vst [vmem:[#allocation4 + $0x8] sm:$0xff] %v704
    $region37: #{resffnet_forward.1} parent=1 // pred_fallthru
      _
    // Predicated region
    $region38: #{resffnet_forward.1} parent=1 // pred_check
      _
    $region39: #{resffnet_forward.1} parent=1 // pred_check_branch
      %708 = sbr.rel (0) target = $region41
    $region40: #{resffnet_forward.1} parent=1 // pred_region
      %710 = vsyncadd [#allocation5], 0
      %s711 = sshll.u32 [#allocation4], 4
      %s712 = int_to_ptr.vmem [resolvable:$true] %s711
      %s713 = sshll.u32 %s7, 4
      %s714 = int_to_ptr.hbm [resolvable:$true] %s713
      %719 = dma.vmem_to_hbm [thread:$0]  %s712, 256, %s714, [#allocation5], 128, 128, 8
    $region41: #{resffnet_forward.1} parent=1 // pred_fallthru
      _
    // Predicated region
    $region42: #{resffnet_forward.1} parent=1 // pred_check
      _
    $region43: #{resffnet_forward.1} parent=1 // pred_check_branch
      %721 = sbr.rel (0) target = $region45
    $region44: #{resffnet_forward.1} parent=1 // pred_region
      %723 = dma.done [#allocation5], 256
    $region45: #{resffnet_forward.1} parent=1 // pred_fallthru
      _
    %724 = vsyncpa [#allocation5], 1

</llo_original>
